<compile_context>
chip_gen: v5e
topology: v5e:2x2
jax: 0.10.0
libtpu: 0.0.40
codegen_flags: <defaults>
</compile_context>

<pallas_src>
import jax
import jax.numpy as jnp
import numpy as np
from jax.experimental import pallas as pl
from jax.experimental.pallas import tpu as pltpu


def _vmem_capacity_bytes():
    """Physical VMEM per core; conservative v7x-sized fallback if query fails."""
    try:
        return int(pltpu.get_tpu_info().vmem_capacity_bytes)
    except Exception:
        return 64 * 1024 * 1024


def _pick_blocks(B, hw, c_local, c_global, c_total, itemsize, block_budget):
    """Pick (b_blk, s_blk, hw_eff):
      * s_blk is lane-dense (multiple of 128) or the full spatial extent,
      * blocks (double-buffered local-in + global-in + out) fit block_budget,
      * prefer full-width spatial rows (contiguous DMA), then grow the batch block.
    hw_eff == hw unless padding to a 128-multiple is required to respect the budget."""

    def step_bytes(b, s):
        # double-buffered local-in + out + (tiny) global-in blocks
        return 2 * b * ((c_local + c_total) * s + c_global) * itemsize

    hw_eff = hw
    if hw % 128 == 0:
        s_cands = [s for s in range(128, hw + 1, 128) if hw % s == 0]
    elif step_bytes(1, hw) <= block_budget:
        s_cands = [hw]                       # full extent fits -> no padding needed
    else:
        hw_eff = -(-hw // 128) * 128         # pad up so we can tile lane-dense
        s_cands = [s for s in range(128, hw_eff + 1, 128) if hw_eff % s == 0]

    # Largest spatial block that fits with b_blk = 1 (fall back to smallest legal).
    s_blk = s_cands[0]
    for s in s_cands:
        if step_bytes(1, s) <= block_budget:
            s_blk = max(s_blk, s)

    # Only once each channel row is a single contiguous run, grow the batch block.
    b_blk = 1
    if s_blk == hw_eff:
        for b in range(1, B + 1):
            if B % b == 0 and step_bytes(b, s_blk) <= block_budget:
                b_blk = b

    return b_blk, s_blk, hw_eff


def _ensure_multicore(B, b_blk, s_blk, hw_eff):
    """If the grid degenerated to a single step, split it so both TCs (v7x) work."""
    if (B // b_blk) * (hw_eff // s_blk) >= 2:
        return b_blk, s_blk
    if b_blk > 1:
        for d in range(b_blk - 1, 0, -1):
            if B % d == 0:
                return d, s_blk
    if hw_eff % 128 == 0 and s_blk > 128:
        for s in range(s_blk - 128, 127, -128):
            if hw_eff % s == 0:
                return b_blk, s
    return b_blk, s_blk


def _fusion_kernel(local_ref, global_ref, out_ref):
    # local_ref:  (b_blk, c_local,  s_blk)
    # global_ref: (b_blk, c_global, 1)
    # out_ref:    (b_blk, c_local + c_global, s_blk)
    loc = local_ref[...]
    b_blk, c_global, _ = global_ref.shape
    s_blk = loc.shape[-1]
    # Per-channel value broadcast across the lane (spatial) axis; one full-tile store.
    g = jnp.broadcast_to(global_ref[...], (b_blk, c_global, s_blk))
    out_ref[...] = jnp.concatenate([loc, g], axis=1)


def fusion_layer(local_input, global_input):
    """local_input: (B, C_l, H, W); global_input: (B, C_g)
    -> (B, C_l + C_g, H, W), matching torch.cat([local, global.expand(...)], dim=1)."""
    B, c_local, H, W = local_input.shape
    Bg, c_global = global_input.shape
    assert B == Bg, "batch dims must match"
    c_total = c_local + c_global
    hw = H * W

    # Promote (never silently downcast) if the two inputs have different dtypes.
    out_dtype = jnp.result_type(local_input.dtype, global_input.dtype)
    itemsize = jnp.dtype(out_dtype).itemsize

    # Lane-dense views: spatial dims flattened onto the lane axis (free reshape);
    # global channels on the sublane axis with a single lane (cheap lane broadcast).
    local_flat = local_input.astype(out_dtype).reshape(B, c_local, hw)
    global_col = global_input.astype(out_dtype).reshape(B, c_global, 1)

    # Generation-aware VMEM sizing (v5e/v6e: 128 MiB, v7x: 64 MiB).
    vmem_cap = _vmem_capacity_bytes()
    block_budget = vmem_cap // 2                     # double-buffered blocks live here
    vmem_limit = int(vmem_cap * 3 // 4)              # explicit scoped-VMEM limit

    b_blk, s_blk, hw_eff = _pick_blocks(
        B, hw, c_local, c_global, c_total, itemsize, block_budget)
    b_blk, s_blk = _ensure_multicore(B, b_blk, s_blk, hw_eff)

    if hw_eff != hw:
        local_flat = jnp.pad(local_flat, ((0, 0), (0, 0), (0, hw_eff - hw)))

    grid = (B // b_blk, hw_eff // s_blk)

    bytes_accessed = itemsize * (
        B * c_local * hw_eff      # local read
        + B * c_global            # global read
        + B * c_total * hw_eff    # fused write
    )
    cost = pl.CostEstimate(flops=0, transcendentals=0,
                           bytes_accessed=int(bytes_accessed))

    out_flat = pl.pallas_call(
        _fusion_kernel,
        out_shape=jax.ShapeDtypeStruct((B, c_total, hw_eff), out_dtype),
        grid_spec=pltpu.PrefetchScalarGridSpec(
            num_scalar_prefetch=0,
            grid=grid,
            in_specs=[
                # Batch-blocked, spatial-chunked, lane-dense local feature slab.
                pl.BlockSpec((b_blk, c_local, s_blk), lambda b, s: (b, 0, s)),
                # Matching batch block of global vectors (channels on sublanes).
                pl.BlockSpec((b_blk, c_global, 1), lambda b, s: (b, 0, 0)),
            ],
            out_specs=pl.BlockSpec((b_blk, c_total, s_blk), lambda b, s: (b, 0, s)),
        ),
        compiler_params=pltpu.CompilerParams(
            dimension_semantics=("parallel", "parallel"),
            vmem_limit_bytes=vmem_limit,
        ),
        cost_estimate=cost,
    )(local_flat, global_col)

    if hw_eff != hw:
        out_flat = out_flat[:, :, :hw]
    return out_flat.reshape(B, c_total, H, W)


if __name__ == "__main__":
    # Small deterministic example shapes consistent with the module's forward.
    B, C_LOCAL, H, W = 2, 4, 16, 16
    C_GLOBAL = 8

    key = jax.random.PRNGKey(0)
    k1, k2 = jax.random.split(key)
    local_input = jax.random.normal(k1, (B, C_LOCAL, H, W), dtype=jnp.float32)
    global_input = jax.random.normal(k2, (B, C_GLOBAL), dtype=jnp.float32)

    out = fusion_layer(local_input, global_input)
    out = jax.block_until_ready(out)

    # Pure-JAX reference (mirrors the PyTorch semantics exactly).
    ref = jnp.concatenate(
        [
            local_input,
            jnp.broadcast_to(global_input[:, :, None, None], (B, C_GLOBAL, H, W)),
        ],
        axis=1,
    )

    np.testing.assert_allclose(np.asarray(out), np.asarray(ref), rtol=0, atol=0)
    assert out.shape == (B, C_LOCAL + C_GLOBAL, H, W)
    print("KERNEL_OK")
</pallas_src>

<mosaic_0001>
module attributes {stable_mosaic.version = 11 : i64} {
  func.func @_fusion_kernel(%arg0: i32, %arg1: i32, %arg2: memref<1x4x256xf32, #tpu.memory_space<vmem>>, %arg3: memref<1x8x1xf32, #tpu.memory_space<vmem>>, %arg4: memref<1x12x256xf32, #tpu.memory_space<vmem>>) attributes {dimension_semantics = [#tpu.dimension_semantics<parallel>, #tpu.dimension_semantics<parallel>], iteration_bounds = array<i64: 2, 1>, scalar_prefetch = 0 : i64, scratch_operands = 0 : i64, tpu.core_type = #tpu.core_type<tc>, window_params = [{transform_indices = @transform_0, window_bounds = array<i64: 1, 4, 256>}, {transform_indices = @transform_1, window_bounds = array<i64: 1, 8, 1>}, {transform_indices = @transform_2, window_bounds = array<i64: 1, 12, 256>}]} {
    %c0 = arith.constant 0 : index
    %c0_0 = arith.constant 0 : index
    %c0_1 = arith.constant 0 : index
    %0 = vector.load %arg2[%c0, %c0_0, %c0_1] : memref<1x4x256xf32, #tpu.memory_space<vmem>>, vector<1x4x256xf32>
    %c0_2 = arith.constant 0 : index
    %c0_3 = arith.constant 0 : index
    %c0_4 = arith.constant 0 : index
    %1 = vector.load %arg3[%c0_2, %c0_3, %c0_4] : memref<1x8x1xf32, #tpu.memory_space<vmem>>, vector<1x8x1xf32>
    %2 = vector.shape_cast %1 : vector<1x8x1xf32> to vector<1x8x1xf32>
    %3 = vector.broadcast %2 : vector<1x8x1xf32> to vector<1x8x256xf32>
    %4 = tpu.concatenate %0, %3 in 1 : vector<1x4x256xf32>, vector<1x8x256xf32> -> vector<1x12x256xf32>
    %c0_5 = arith.constant 0 : index
    %c0_6 = arith.constant 0 : index
    %c0_7 = arith.constant 0 : index
    %5 = vector.load %arg4[%c0_5, %c0_6, %c0_7] : memref<1x12x256xf32, #tpu.memory_space<vmem>>, vector<1x12x256xf32>
    tpu.vector_store %arg4[%c0_5, %c0_6, %c0_7], %4 {strides = array<i32>} : memref<1x12x256xf32, #tpu.memory_space<vmem>>, vector<1x12x256xf32>,
    return
  }
  func.func @transform_0(%arg0: i32, %arg1: i32) -> (i32, i32, i32) {
    %c0_i32 = arith.constant 0 : i32
    %c0_i32_0 = arith.constant 0 : i32
    return %arg0, %c0_i32, %arg1 : i32, i32, i32
  }
  func.func @transform_1(%arg0: i32, %arg1: i32) -> (i32, i32, i32) {
    %c0_i32 = arith.constant 0 : i32
    %c0_i32_0 = arith.constant 0 : i32
    %c0_i32_1 = arith.constant 0 : i32
    return %arg0, %c0_i32, %c0_i32_0 : i32, i32, i32
  }
  func.func @transform_2(%arg0: i32, %arg1: i32) -> (i32, i32, i32) {
    %c0_i32 = arith.constant 0 : i32
    %c0_i32_0 = arith.constant 0 : i32
    return %arg0, %c0_i32, %arg1 : i32, i32, i32
  }
}

</mosaic_0001>

<llo_original>
// kernel: tpu_custom_call.1
$region0: #{tpu_custom_call.1}
  #allocation0 [shape = 'u32[]', space=smem, size = 0x4, offset = 0x4, fixed_abs, tag = 'smem constant byte address 0x4 - core index']
  #allocation1 [shape = 'u32[72,128]{1,0:T(1,128)}', space=vmem, size = 0x9000, scoped, tag = 'internal scratch']
  %s0 = inlined_call_operand.vmem [shape: f32[2,4,256], index: 0, kind: input, shape index: {}]
  %s1 = inlined_call_operand.vmem [shape: f32[2,8,1], index: 1, kind: input, shape index: {}]
  %s2 = inlined_call_operand.vmem [shape: f32[2,12,256], index: 2, kind: output, shape index: {}]
  %s3 = sld [smem:[#allocation0]]
  $region41: #{tpu_custom_call.1} parent=0
    _
  %s5 = ssub.s32 1, %s3
  %s6 = scalar_select 0, %s5, %s3
  loop: start=0, step=1, limit=4
  $region2: #{tpu_custom_call.1} parent=0 // loop_pre_header
    _
  $region3: #{tpu_custom_call.1} parent=0 // loop_header
    %s8 = sphi 0, %s12
    %p9 = scmp.ge.s32.totalorder %s8, 4
    %s15 = sphi 0, %s27
    %s16 = sphi 0, %s23
    %s17 = sphi 0, %s15
    %s18 = sphi 0, %s16
    %s19 = sphi 0, %s17
    %s20 = sphi 0, %s18
    %s32 = sphi 0, %s34
    %s35 = sphi 0, %s32
    %s36 = sphi 0, %s35
    %s52 = sphi 0, %s36
    %s58 = sphi 0, %s60
    %s61 = sphi 0, %s58
    %s62 = sphi 0, %s61
    %s78 = sphi 0, %s62
    %s86 = sphi 0, %s88
    %s89 = sphi 0, %s86
    %s90 = sphi 0, %s89
    %s106 = sphi 0, %s90
  $region4: #{tpu_custom_call.1} parent=0 // loop_header_branch
    %11 = sbr.rel (%p9) target = $region8
  $region5: #{tpu_custom_call.1} parent=0 // loop_body
    %s13 = ssub.s32 %s8, 1
    %s14 = ssub.s32 %s8, 2
    %s21 = sadd.s32 1, %s16
    %p22 = scmp.ge.s32.totalorder %s21, 1
    %s23 = scalar_select %p22, 0, %s21
    %s24 = sadd.s32 1, %s15
    %s25 = scalar_select %p22, %s24, %s15
    %p26 = scmp.ge.s32.totalorder %s25, 2
    %s27 = scalar_select %p26, 0, %s25
    %s28 = ssub.s32 %s15, %s27
    %s29 = ssub.s32 %s16, %s23
    %s30 = sor.u32 %s28, %s29
    %p31 = scmp.eq.s32.totalorder %s30, 0
    %s33 = sadd.s32 %s32, 1
    %s34 = scalar_select %p31, %s32, %s33
    %p37 = pneg %p31
    %p38 = scmp.eq.s32.totalorder %s8, 1
    %p39 = por %p37, %p38
    %p40 = scmp.ne.s32.totalorder %s32, %s35
    %p41 = scmp.eq.s32.totalorder %s8, 0
    %p42 = por %p40, %p41
    %p43 = scmp.ne.s32.totalorder %s32, %s35
    %p44 = scmp.eq.s32.totalorder %s13, 1
    %p45 = por %p43, %p44
    %p46 = scmp.ne.s32.totalorder %s35, %s36
    %p47 = scmp.eq.s32.totalorder %s13, 0
    %p48 = por %p46, %p47
    %p49 = scmp.ne.s32.totalorder %s35, %s36
    %p50 = scmp.eq.s32.totalorder %s14, 1
    %p51 = por %p49, %p50
    %p53 = scmp.ne.s32.totalorder %s36, %s52
    %p54 = scmp.eq.s32.totalorder %s14, 0
    %p55 = por %p53, %p54
    %s56 = ssub.s32 %s15, %s27
    %p57 = scmp.eq.s32.totalorder %s56, 0
    %s59 = sadd.s32 %s58, 1
    %s60 = scalar_select %p57, %s58, %s59
    %p63 = pneg %p57
    %p64 = scmp.eq.s32.totalorder %s8, 1
    %p65 = por %p63, %p64
    %p66 = scmp.ne.s32.totalorder %s58, %s61
    %p67 = scmp.eq.s32.totalorder %s8, 0
    %p68 = por %p66, %p67
    %p69 = scmp.ne.s32.totalorder %s58, %s61
    %p70 = scmp.eq.s32.totalorder %s13, 1
    %p71 = por %p69, %p70
    %p72 = scmp.ne.s32.totalorder %s61, %s62
    %p73 = scmp.eq.s32.totalorder %s13, 0
    %p74 = por %p72, %p73
    %p75 = scmp.ne.s32.totalorder %s61, %s62
    %p76 = scmp.eq.s32.totalorder %s14, 1
    %p77 = por %p75, %p76
    %p79 = scmp.ne.s32.totalorder %s62, %s78
    %p80 = scmp.eq.s32.totalorder %s14, 0
    %p81 = por %p79, %p80
    %s82 = ssub.s32 %s15, %s27
    %s83 = ssub.s32 %s16, %s23
    %s84 = sor.u32 %s82, %s83
    %p85 = scmp.eq.s32.totalorder %s84, 0
    %s87 = sadd.s32 %s86, 1
    %s88 = scalar_select %p85, %s86, %s87
    %p91 = pneg %p85
    %p92 = scmp.eq.s32.totalorder %s8, 1
    %p93 = por %p91, %p92
    %p94 = scmp.ne.s32.totalorder %s86, %s89
    %p95 = scmp.eq.s32.totalorder %s8, 0
    %p96 = por %p94, %p95
    %p97 = scmp.ne.s32.totalorder %s86, %s89
    %p98 = scmp.eq.s32.totalorder %s13, 1
    %p99 = por %p97, %p98
    %p100 = scmp.ne.s32.totalorder %s89, %s90
    %p101 = scmp.eq.s32.totalorder %s13, 0
    %p102 = por %p100, %p101
    %p103 = scmp.ne.s32.totalorder %s89, %s90
    %p104 = scmp.eq.s32.totalorder %s14, 1
    %p105 = por %p103, %p104
    %p107 = scmp.ne.s32.totalorder %s90, %s106
    %p108 = scmp.eq.s32.totalorder %s14, 0
    %p109 = por %p107, %p108
    %p110 = scmp.le.s32.totalorder 1, %s8
    %p111 = scmp.lt.s32.totalorder %s8, 3
    %p112 = pnand %p110, %p111
    %p113 = pneg %p112
    // Predicated region
    $region9: #{tpu_custom_call.1} parent=5 // pred_check
      _
    $region10: #{tpu_custom_call.1} parent=5 // pred_check_branch
      %115 = sbr.rel (%p112) target = $region12
    $region11: #{tpu_custom_call.1} parent=5 // pred_region
      %s116 = ssub.s32 %s8, 1
    $region12: #{tpu_custom_call.1} parent=5 // pred_fallthru
      _
    %p117 = scmp.lt.s32.totalorder %s8, 2
    // Predicated region
    $region13: #{tpu_custom_call.1} parent=5 // pred_check
      %p118 = pneg %p117
    $region14: #{tpu_custom_call.1} parent=5 // pred_check_branch
      %120 = sbr.rel (%p118) target = $region16
    $region15: #{tpu_custom_call.1} parent=5 // pred_region
      // Predicated region
      $region17: #{tpu_custom_call.1} parent=15 // pred_check
        %p121 = pneg %p42
      $region18: #{tpu_custom_call.1} parent=15 // pred_check_branch
        %123 = sbr.rel (%p121) target = $region20
      $region19: #{tpu_custom_call.1} parent=15 // pred_region
        %s124 = smul.u32 2, %s16
        %p125 = scmp.lt.s32.totalorder %s15, 1
        %s126 = scalar_select %p125, %s15, 1
        %p127 = scmp.lt.s32.totalorder %s124, 1
        %s128 = scalar_select %p127, %s124, 1
        %s129 = smul.addr %s126, 2
        %s130 = sadd.s32 %s128, %s129
        %s131 = smul.addr %s130, 4
        %s132 = scalar_lea.vmem %s0, %s131
        %s133 = smul.u32 2, %s16
      $region20: #{tpu_custom_call.1} parent=15 // pred_fallthru
        _
      // Predicated region
      $region21: #{tpu_custom_call.1} parent=15 // pred_check
        %p134 = pneg %p68
      $region22: #{tpu_custom_call.1} parent=15 // pred_check_branch
        %136 = sbr.rel (%p134) target = $region24
      $region23: #{tpu_custom_call.1} parent=15 // pred_region
        %p137 = scmp.lt.s32.totalorder %s15, 1
        %s138 = scalar_select %p137, %s15, 1
        %s139 = smul.addr %s138, 8
        %s140 = scalar_lea.vmem %s1, %s139
      $region24: #{tpu_custom_call.1} parent=15 // pred_fallthru
        _
    $region16: #{tpu_custom_call.1} parent=5 // pred_fallthru
      _
    %p141 = scmp.le.s32.totalorder 1, %s8
    %p142 = scmp.lt.s32.totalorder %s8, 3
    %p143 = pnand %p141, %p142
    %p144 = pneg %p143
    // Predicated region
    $region25: #{tpu_custom_call.1} parent=5 // pred_check
      _
    $region26: #{tpu_custom_call.1} parent=5 // pred_check_branch
      %146 = sbr.rel (%p143) target = $region28
    $region27: #{tpu_custom_call.1} parent=5 // pred_region
      %s147 = ssub.s32 %s8, 1
      %s148 = smul.u32 2, %s18
      %p149 = scmp.lt.s32.totalorder %s17, 1
      %s150 = scalar_select %p149, %s17, 1
      %p151 = scmp.lt.s32.totalorder %s148, 1
      %s152 = scalar_select %p151, %s148, 1
      %s153 = smul.addr %s150, 2
      %s154 = sadd.s32 %s152, %s153
      %s155 = smul.addr %s154, 4
      %s156 = scalar_lea.vmem %s0, %s155
      %p157 = pneg %p48
      %p158 = pneg %p45
      %p159 = scmp.lt.s32.totalorder %s17, 1
      %s160 = scalar_select %p159, %s17, 1
      %s161 = smul.addr %s160, 8
      %s162 = scalar_lea.vmem %s1, %s161
      %p163 = pneg %p74
      %p164 = pneg %p71
      %p165 = pneg %p102
      %p166 = pneg %p99
      %s167 = smul.u32 2, %s18
      %p168 = scmp.lt.s32.totalorder %s17, 1
      %s169 = scalar_select %p168, %s17, 1
      %p170 = scmp.lt.s32.totalorder %s167, 1
      %s171 = scalar_select %p170, %s167, 1
      %s172 = smul.addr %s169, 4
      %s173 = sadd.s32 %s171, %s172
      %s174 = smul.addr %s173, 8
      %s175 = scalar_lea.vmem %s2, %s174
      %s176 = smul.u32 2, %s18
      %p177 = scmp.lt.s32.totalorder %s17, 1
      %s178 = scalar_select %p177, %s17, 1
      %p179 = scmp.lt.s32.totalorder %s176, 1
      %s180 = scalar_select %p179, %s176, 1
      %s181 = smul.addr %s178, 2
      %s182 = sadd.s32 %s180, %s181
      %s183 = smul.addr %s182, 4
      %s184 = scalar_lea.vmem %s0, %s183
      %s185 = smul.u32 2, %s18
      %p186 = scmp.lt.s32.totalorder %s17, 1
      %s187 = scalar_select %p186, %s17, 1
      %s188 = smul.addr %s187, 8
      %s189 = scalar_lea.vmem %s1, %s188
      %s190 = smul.u32 2, %s18
      %p191 = scmp.lt.s32.totalorder %s17, 1
      %s192 = scalar_select %p191, %s17, 1
      %p193 = scmp.lt.s32.totalorder %s190, 1
      %s194 = scalar_select %p193, %s190, 1
      %s195 = smul.addr %s192, 4
      %s196 = sadd.s32 %s194, %s195
      %s197 = smul.addr %s196, 8
      %s198 = scalar_lea.vmem %s2, %s197
      %s199 = smul.u32 2, %s18
      %v200 = vld [vmem:[%s184] sm:$0xff]
      %v201 = vld [vmem:[%s189] sm:$0xff]
      %203 = vset.pattern.permute.xlu0 0
      %204 = vperm.xlu0 %203, %v201
      %v205 = vpop.permute.xlu0 %204
      %207 = vst [vmem:[#allocation1] ss:$2 sm:$0xff] %v200
      %v208 = vld.sshfl [vmem:[#allocation1] sm:$0xff pattern:$0x75316420]
      %v209 = vld.sshfl [vmem:[#allocation1 + $0x8] sm:$0xff pattern:$0x75316420]
      %v212 = vrot.slane %v205, 4
      %vm214 = vcmask 1043456
      %v215 = vsel %vm214, %v208, %v212
      %v216 = vsel %vm214, %v209, %v212
      %217 = vst [vmem:[%s198] sm:$0xff] %v215
      %218 = vst [vmem:[%s198 + $0x8] sm:$0xff] %v216
      %219 = vst [vmem:[%s198 + $0x10] sm:$0xf] %v212
      %220 = vst [vmem:[%s198 + $0x18] sm:$0xf] %v212
      %s221 = smul.u32 2, %s18
      %p222 = scmp.lt.s32.totalorder %s17, 1
      %s223 = scalar_select %p222, %s17, 1
      %p224 = scmp.lt.s32.totalorder %s221, 1
      %s225 = scalar_select %p224, %s221, 1
      %s226 = smul.addr %s223, 4
      %s227 = sadd.s32 %s225, %s226
      %s228 = smul.addr %s227, 8
      %s229 = scalar_lea.vmem %s2, %s228
      // Predicated region
      $region29: #{tpu_custom_call.1} parent=27 // pred_check
        %p230 = pneg %p99
      $region30: #{tpu_custom_call.1} parent=27 // pred_check_branch
        %232 = sbr.rel (%p230) target = $region32
      $region31: #{tpu_custom_call.1} parent=27 // pred_region
        %s233 = smul.u32 2, %s18
      $region32: #{tpu_custom_call.1} parent=27 // pred_fallthru
        _
    $region28: #{tpu_custom_call.1} parent=5 // pred_fallthru
      _
    %p234 = scmp.le.s32.totalorder 2, %s8
    // Predicated region
    $region33: #{tpu_custom_call.1} parent=5 // pred_check
      %p235 = pneg %p234
    $region34: #{tpu_custom_call.1} parent=5 // pred_check_branch
      %237 = sbr.rel (%p235) target = $region36
    $region35: #{tpu_custom_call.1} parent=5 // pred_region
      %s238 = ssub.s32 %s8, 2
      // Predicated region
      $region37: #{tpu_custom_call.1} parent=35 // pred_check
        %p239 = pneg %p105
      $region38: #{tpu_custom_call.1} parent=35 // pred_check_branch
        %241 = sbr.rel (%p239) target = $region40
      $region39: #{tpu_custom_call.1} parent=35 // pred_region
        %s242 = smul.u32 2, %s20
        %p243 = scmp.lt.s32.totalorder %s19, 1
        %s244 = scalar_select %p243, %s19, 1
        %p245 = scmp.lt.s32.totalorder %s242, 1
        %s246 = scalar_select %p245, %s242, 1
        %s247 = smul.addr %s244, 4
        %s248 = sadd.s32 %s246, %s247
        %s249 = smul.addr %s248, 8
        %s250 = scalar_lea.vmem %s2, %s249
      $region40: #{tpu_custom_call.1} parent=35 // pred_fallthru
        _
    $region36: #{tpu_custom_call.1} parent=5 // pred_fallthru
      _
  $region6: #{tpu_custom_call.1} parent=0 // loop_footer
    %s12 = sadd.s32 1, %s8
  $region7: #{tpu_custom_call.1} parent=0 // loop_footer_branch
    %7 = sbr.rel target = $region3
  $region8: #{tpu_custom_call.1} parent=0 // loop_exit
    _

</llo_original>
